<compile_context>
chip_gen: v7x
topology: tpu7x:2x2x1
jax: 0.10.0
libtpu: 0.0.40
codegen_flags: <defaults>
</compile_context>

<pallas_src>
import math

import jax
import jax.numpy as jnp
from jax.experimental import pallas as pl
from jax.experimental.pallas import tpu as pltpu

MAXVAR = -2
MINVAR = -3
LANE = 128


def _triple(v):
    return (v, v, v) if isinstance(v, int) else tuple(v)


def _round_up(v, m):
    return (v + m - 1) // m * m


# ---------------------------------------------------------------------------
# Kernel 1: sample the Radial-posterior weight once + closed-form Gaussian KL.
# Inputs are zero-padded in the wrapper to (K_pad, Cout_pad) so the kernel is
# fully lane-dense; padded entries contribute exactly 0 to both outputs
# (mu=ls=eps=prior_mu=prior_ls=0  =>  w_pad=0 and kl_el=0).
# ---------------------------------------------------------------------------
def _sample_weight_and_kl(mu_p, ls_p, eps_p, pmu_p, pls_p, r_arr):
    Kp, Cp = mu_p.shape

    def kernel(mu_ref, ls_ref, eps_ref, pmu_ref, pls_ref, r_ref, w_ref, kl_ref):
        rv = r_ref[0, 0]
        mu, ls = mu_ref[...], ls_ref[...]
        # Radial posterior sample (f32 math, stored bf16 for the MXU matmul).
        w = mu + jnp.exp(0.5 * ls) * eps_ref[...] * rv
        w_ref[...] = w.astype(w_ref.dtype)
        # Closed-form Gaussian KL, summed over all (padded) weight entries.
        pmu, pls = pmu_ref[...], pls_ref[...]
        kl_el = 0.5 * (jnp.exp(ls - pls) + (mu - pmu) ** 2 * jnp.exp(-pls)
                       - 1.0 + pls - ls)
        row = jnp.sum(kl_el, axis=1, keepdims=True)
        kl_ref[...] = jnp.sum(row, axis=0, keepdims=True)

    spec = pl.BlockSpec((Kp, Cp), lambda i: (0, 0))
    w_bf16, kl = pl.pallas_call(
        kernel,
        out_shape=(jax.ShapeDtypeStruct((Kp, Cp), jnp.bfloat16),
                   jax.ShapeDtypeStruct((1, 1), jnp.float32)),
        grid=(1,),
        in_specs=[spec, spec, spec, spec, spec,
                  pl.BlockSpec(memory_space=pltpu.MemorySpace.SMEM)],
        out_specs=(spec, pl.BlockSpec((1, 1), lambda i: (0, 0))),
    )(mu_p, ls_p, eps_p, pmu_p, pls_p, r_arr)
    return w_bf16, kl[0, 0]


# ---------------------------------------------------------------------------
# Kernel 2: the conv hot path as a tiled, lane-dense MXU matmul.
#   patches_p : (M_pad, K_pad)  bf16 im2col patch rows
#   w_bf16    : (K_pad, C_pad)  bf16 sampled weight matrix (constant index_map
#               -> DMA'd once; the extra double-buffer is 32 KiB, negligible)
# ---------------------------------------------------------------------------
def _conv_as_matmul(patches_p, w_bf16, tile_m):
    Mp, Kp = patches_p.shape
    _, Cp = w_bf16.shape

    def kernel(p_ref, w_ref, o_ref):
        o_ref[...] = jnp.dot(p_ref[...], w_ref[...],
                             preferred_element_type=jnp.float32).astype(o_ref.dtype)

    return pl.pallas_call(
        kernel,
        out_shape=jax.ShapeDtypeStruct((Mp, Cp), jnp.float32),
        grid=(Mp // tile_m,),
        in_specs=[
            pl.BlockSpec((tile_m, Kp), lambda i: (i, 0)),
            pl.BlockSpec((Kp, Cp), lambda i: (0, 0)),   # constant: fetched once
        ],
        out_specs=pl.BlockSpec((tile_m, Cp), lambda i: (i, 0)),
        compiler_params=pltpu.CompilerParams(dimension_semantics=("parallel",)),
    )(patches_p, w_bf16)


def bayes_conv3d_forward(x, post_mu, post_logsigmasq, prior_mu, prior_logsigmasq,
                         eps_dir, r, *, stride=1, padding=0, dilation=1, groups=1):
    """Forward of the Bayesian Conv3d layer: returns (output_NCDHW, kl)."""
    assert groups == 1, "only groups=1 is implemented"
    stride, padding, dilation = _triple(stride), _triple(padding), _triple(dilation)
    N, Cin, D, H, W = x.shape
    Cout, _, kD, kH, kW = post_mu.shape
    sd, sh, sw = stride
    pd, ph, pw = padding
    dd, dh, dw = dilation
    Do = (D + 2 * pd - dd * (kD - 1) - 1) // sd + 1
    Ho = (H + 2 * ph - dh * (kH - 1) - 1) // sh + 1
    Wo = (W + 2 * pw - dw * (kW - 1) - 1) // sw + 1

    K = kD * kH * kW * Cin
    Kp = _round_up(K, LANE)          # 108 -> 128 : one MXU pass on v5e
    Cp = _round_up(Cout, LANE)       # 8  -> 128  : lane-dense output stores

    # --- weight-matrix layout (kd, kh, kw, cin) rows x cout cols, zero-padded ---
    def to_wmat(a):
        a2 = jnp.transpose(a, (2, 3, 4, 1, 0)).reshape(K, Cout).astype(jnp.float32)
        return jnp.pad(a2, ((0, Kp - K), (0, Cp - Cout)))

    r_arr = jnp.asarray(r, jnp.float32).reshape(1, 1)
    w_bf16, kl = _sample_weight_and_kl(
        to_wmat(post_mu), to_wmat(post_logsigmasq), to_wmat(eps_dir),
        to_wmat(prior_mu), to_wmat(prior_logsigmasq), r_arr)

    # --- im2col patch matrix (wrapper / XLA): rows = (n,d,h,w), cols = (kd,kh,kw,cin)
    x_pad = jnp.pad(x, ((0, 0), (0, 0), (pd, pd), (ph, ph), (pw, pw)))
    x_cl = jnp.transpose(x_pad, (0, 2, 3, 4, 1)).astype(jnp.bfloat16)
    cols = []
    for kd in range(kD):
        for kh in range(kH):
            for kw in range(kW):
                cols.append(x_cl[:,
                                 kd * dd: kd * dd + (Do - 1) * sd + 1: sd,
                                 kh * dh: kh * dh + (Ho - 1) * sh + 1: sh,
                                 kw * dw: kw * dw + (Wo - 1) * sw + 1: sw,
                                 :])
    patches = jnp.concatenate(cols, axis=-1)        # (N, Do, Ho, Wo, K)
    M = N * Do * Ho * Wo
    tile_m = min(256, _round_up(M, 8))
    Mp = _round_up(M, tile_m)
    patches_p = jnp.pad(patches.reshape(M, K), ((0, Mp - M), (0, Kp - K)))

    out_p = _conv_as_matmul(patches_p, w_bf16, tile_m)          # (Mp, Cp) f32
    out = out_p[:M, :Cout].reshape(N, Do, Ho, Wo, Cout)
    output = jnp.transpose(out, (0, 4, 1, 2, 3))                # back to NCDHW
    return output, kl


if __name__ == "__main__":
    # small config: Conv3d(in_channels=4, out_channels=8, kernel_size=3, padding=1)
    N, Cin, Cout = 2, 4, 8
    D = H = W = 8
    ksize, stride, padding, dilation = 3, 1, 1, 1
    kD = kH = kW = ksize

    key = jax.random.PRNGKey(0)
    kx, kmu, kls, keps, kr = jax.random.split(key, 5)

    # deterministic parameter init mirroring reset_parameters / reset_priors
    n_fan = Cin * kD * kH * kW
    stdv = 1.0 / math.sqrt(n_fan)
    wshape = (Cout, Cin, kD, kH, kW)
    post_mu = jax.random.uniform(kmu, wshape, jnp.float32, -stdv, stdv)
    post_logsigmasq = jax.random.uniform(kls, wshape, jnp.float32, MINVAR, MAXVAR)
    prior_mu = jnp.zeros(wshape, jnp.float32)
    prior_logsigmasq = jnp.zeros(wshape, jnp.float32)

    # Radial posterior noise: unit-direction eps and scalar radius r
    eps = jax.random.normal(keps, wshape, jnp.float32)
    eps_dir = eps / jnp.sqrt(jnp.sum(eps ** 2))
    r = jax.random.normal(kr, (), jnp.float32)

    x = jax.random.normal(kx, (N, Cin, D, H, W), jnp.float32)

    output, kl = bayes_conv3d_forward(
        x, post_mu, post_logsigmasq, prior_mu, prior_logsigmasq, eps_dir, r,
        stride=stride, padding=padding, dilation=dilation, groups=1)
    output, kl = jax.block_until_ready((output, kl))

    # reference: same bf16 inputs / f32 accumulation as the kernel
    w_sample = post_mu + jnp.exp(0.5 * post_logsigmasq) * eps_dir * r
    conv_args = dict(window_strides=(stride,) * 3,
                     padding=[(padding, padding)] * 3,
                     rhs_dilation=(dilation,) * 3,
                     dimension_numbers=("NCDHW", "OIDHW", "NCDHW"))
    ref_bf16 = jax.lax.conv_general_dilated(
        x.astype(jnp.bfloat16), w_sample.astype(jnp.bfloat16),
        preferred_element_type=jnp.float32, **conv_args)
    ref_f32 = jax.lax.conv_general_dilated(x, w_sample, **conv_args)
    kl_ref = 0.5 * jnp.sum(
        jnp.exp(post_logsigmasq - prior_logsigmasq)
        + (post_mu - prior_mu) ** 2 * jnp.exp(-prior_logsigmasq)
        - 1.0 + prior_logsigmasq - post_logsigmasq)

    assert output.shape == (N, Cout, D, H, W), output.shape
    assert jnp.allclose(output, ref_bf16, atol=2e-3, rtol=2e-3), "conv mismatch (bf16 ref)"
    assert jnp.allclose(output, ref_f32, atol=1e-1, rtol=1e-1), "conv mismatch (f32 ref)"
    assert jnp.allclose(kl, kl_ref, atol=1e-3, rtol=1e-4), "kl mismatch"
    print("KERNEL_OK")
</pallas_src>

<mosaic_0001>
module attributes {stable_mosaic.version = 11 : i64} {
  func.func @kernel(%arg0: i32, %arg1: memref<128x128xf32, #tpu.memory_space<vmem>>, %arg2: memref<128x128xf32, #tpu.memory_space<vmem>>, %arg3: memref<128x128xf32, #tpu.memory_space<vmem>>, %arg4: memref<128x128xf32, #tpu.memory_space<vmem>>, %arg5: memref<128x128xf32, #tpu.memory_space<vmem>>, %arg6: memref<1x1xf32, #tpu.memory_space<smem>>, %arg7: memref<128x128xbf16, #tpu.memory_space<vmem>>, %arg8: memref<1x1xf32, #tpu.memory_space<vmem>>) attributes {dimension_semantics = [#tpu.dimension_semantics<arbitrary>], iteration_bounds = array<i64: 1>, scalar_prefetch = 0 : i64, scratch_operands = 0 : i64, tpu.core_type = #tpu.core_type<tc>, window_params = [{pipeline_mode = #tpu.pipeline_mode<synchronous>, transform_indices = @transform_0, window_bounds = array<i64: 128, 128>}, {pipeline_mode = #tpu.pipeline_mode<synchronous>, transform_indices = @transform_1, window_bounds = array<i64: 128, 128>}, {pipeline_mode = #tpu.pipeline_mode<synchronous>, transform_indices = @transform_2, window_bounds = array<i64: 128, 128>}, {pipeline_mode = #tpu.pipeline_mode<synchronous>, transform_indices = @transform_3, window_bounds = array<i64: 128, 128>}, {pipeline_mode = #tpu.pipeline_mode<synchronous>, transform_indices = @transform_4, window_bounds = array<i64: 128, 128>}, {transform_indices = @transform_5, window_bounds = array<i64: 1, 1>}, {pipeline_mode = #tpu.pipeline_mode<synchronous>, transform_indices = @transform_6, window_bounds = array<i64: 128, 128>}, {pipeline_mode = #tpu.pipeline_mode<synchronous>, transform_indices = @transform_7, window_bounds = array<i64: 1, 1>}]} {
    %c0 = arith.constant 0 : index
    %c0_0 = arith.constant 0 : index
    %0 = memref.load %arg6[%c0, %c0_0] : memref<1x1xf32, #tpu.memory_space<smem>>
    %c0_1 = arith.constant 0 : index
    %c0_2 = arith.constant 0 : index
    %1 = vector.load %arg1[%c0_1, %c0_2] : memref<128x128xf32, #tpu.memory_space<vmem>>, vector<128x128xf32>
    %c0_3 = arith.constant 0 : index
    %c0_4 = arith.constant 0 : index
    %2 = vector.load %arg2[%c0_3, %c0_4] : memref<128x128xf32, #tpu.memory_space<vmem>>, vector<128x128xf32>
    %cst = arith.constant 5.000000e-01 : f32
    %3 = vector.broadcast %cst : f32 to vector<128x128xf32>
    %4 = arith.mulf %3, %2 : vector<128x128xf32>
    %5 = math.exp %4 : vector<128x128xf32>
    %c0_5 = arith.constant 0 : index
    %c0_6 = arith.constant 0 : index
    %6 = vector.load %arg3[%c0_5, %c0_6] : memref<128x128xf32, #tpu.memory_space<vmem>>, vector<128x128xf32>
    %7 = arith.mulf %5, %6 : vector<128x128xf32>
    %8 = vector.broadcast %0 : f32 to vector<128x128xf32>
    %9 = arith.mulf %7, %8 : vector<128x128xf32>
    %10 = arith.addf %1, %9 : vector<128x128xf32>
    %11 = arith.truncf %10 : vector<128x128xf32> to vector<128x128xbf16>
    %c0_7 = arith.constant 0 : index
    %c0_8 = arith.constant 0 : index
    %12 = vector.load %arg7[%c0_7, %c0_8] : memref<128x128xbf16, #tpu.memory_space<vmem>>, vector<128x128xbf16>
    tpu.vector_store %arg7[%c0_7, %c0_8], %11 {strides = array<i32>} : memref<128x128xbf16, #tpu.memory_space<vmem>>, vector<128x128xbf16>,
    %c0_9 = arith.constant 0 : index
    %c0_10 = arith.constant 0 : index
    %13 = vector.load %arg4[%c0_9, %c0_10] : memref<128x128xf32, #tpu.memory_space<vmem>>, vector<128x128xf32>
    %c0_11 = arith.constant 0 : index
    %c0_12 = arith.constant 0 : index
    %14 = vector.load %arg5[%c0_11, %c0_12] : memref<128x128xf32, #tpu.memory_space<vmem>>, vector<128x128xf32>
    %15 = arith.subf %2, %14 : vector<128x128xf32>
    %16 = math.exp %15 : vector<128x128xf32>
    %17 = arith.subf %1, %13 : vector<128x128xf32>
    %18 = arith.mulf %17, %17 : vector<128x128xf32>
    %cst_13 = arith.constant 0.000000e+00 : f32
    %19 = vector.broadcast %cst_13 : f32 to vector<128x128xf32>
    %20 = arith.subf %19, %14 : vector<128x128xf32>
    %21 = math.exp %20 : vector<128x128xf32>
    %22 = arith.mulf %18, %21 : vector<128x128xf32>
    %23 = arith.addf %16, %22 : vector<128x128xf32>
    %cst_14 = arith.constant 1.000000e+00 : f32
    %24 = vector.broadcast %cst_14 : f32 to vector<128x128xf32>
    %25 = arith.subf %23, %24 : vector<128x128xf32>
    %26 = arith.addf %25, %14 : vector<128x128xf32>
    %27 = arith.subf %26, %2 : vector<128x128xf32>
    %cst_15 = arith.constant 5.000000e-01 : f32
    %28 = vector.broadcast %cst_15 : f32 to vector<128x128xf32>
    %29 = arith.mulf %28, %27 : vector<128x128xf32>
    %cst_16 = arith.constant dense<0.000000e+00> : vector<128xf32>
    %30 = vector.multi_reduction <add>, %29, %cst_16 [1] : vector<128x128xf32> to vector<128xf32>
    %31 = vector.shape_cast %30 : vector<128xf32> to vector<128x1xf32>
    %cst_17 = arith.constant dense<0.000000e+00> : vector<1xf32>
    %32 = vector.multi_reduction <add>, %31, %cst_17 [0] : vector<128x1xf32> to vector<1xf32>
    %33 = vector.shape_cast %32 : vector<1xf32> to vector<1x1xf32>
    %c0_18 = arith.constant 0 : index
    %c0_19 = arith.constant 0 : index
    %34 = vector.load %arg8[%c0_18, %c0_19] : memref<1x1xf32, #tpu.memory_space<vmem>>, vector<1x1xf32>
    tpu.vector_store %arg8[%c0_18, %c0_19], %33 {strides = array<i32>} : memref<1x1xf32, #tpu.memory_space<vmem>>, vector<1x1xf32>,
    return
  }
  func.func @transform_0(%arg0: i32) -> (i32, i32) {
    %c0_i32 = arith.constant 0 : i32
    %c0_i32_0 = arith.constant 0 : i32
    %c0_i32_1 = arith.constant 0 : i32
    return %c0_i32, %c0_i32_0 : i32, i32
  }
  func.func @transform_1(%arg0: i32) -> (i32, i32) {
    %c0_i32 = arith.constant 0 : i32
    %c0_i32_0 = arith.constant 0 : i32
    %c0_i32_1 = arith.constant 0 : i32
    return %c0_i32, %c0_i32_0 : i32, i32
  }
  func.func @transform_2(%arg0: i32) -> (i32, i32) {
    %c0_i32 = arith.constant 0 : i32
    %c0_i32_0 = arith.constant 0 : i32
    %c0_i32_1 = arith.constant 0 : i32
    return %c0_i32, %c0_i32_0 : i32, i32
  }
  func.func @transform_3(%arg0: i32) -> (i32, i32) {
    %c0_i32 = arith.constant 0 : i32
    %c0_i32_0 = arith.constant 0 : i32
    %c0_i32_1 = arith.constant 0 : i32
    return %c0_i32, %c0_i32_0 : i32, i32
  }
  func.func @transform_4(%arg0: i32) -> (i32, i32) {
    %c0_i32 = arith.constant 0 : i32
    %c0_i32_0 = arith.constant 0 : i32
    %c0_i32_1 = arith.constant 0 : i32
    return %c0_i32, %c0_i32_0 : i32, i32
  }
  func.func @transform_5(%arg0: i32) -> (i32, i32) {
    %c0_i32 = arith.constant 0 : i32
    %c0_i32_0 = arith.constant 0 : i32
    %c0_i32_1 = arith.constant 0 : i32
    return %c0_i32, %c0_i32_0 : i32, i32
  }
  func.func @transform_6(%arg0: i32) -> (i32, i32) {
    %c0_i32 = arith.constant 0 : i32
    %c0_i32_0 = arith.constant 0 : i32
    %c0_i32_1 = arith.constant 0 : i32
    return %c0_i32, %c0_i32_0 : i32, i32
  }
  func.func @transform_7(%arg0: i32) -> (i32, i32) {
    %c0_i32 = arith.constant 0 : i32
    %c0_i32_0 = arith.constant 0 : i32
    %c0_i32_1 = arith.constant 0 : i32
    return %c0_i32, %c0_i32_0 : i32, i32
  }
}

</mosaic_0001>

<llo_original>
// kernel: tpu_custom_call.1
$region0: #{tpu_custom_call.1}
  #allocation0 [shape = 'u32[]', space=smem, size = 0x4, offset = 0x4, fixed_abs, tag = 'smem constant byte address 0x4 - core index']
  #allocation1 [shape = 'u32[144,128]{1,0:T(1,128)}', space=vmem, size = 0x12000, scoped, tag = 'internal scratch']
  #allocation2 [shape = 'f32[1,1]{1,0:T(1,128)S(6)}', space=smem, size = 0x200, scoped, tag = 'scoped memory for tpu_custom_call.1']
  %s0 = inlined_call_operand.hbm [shape: f32[128,128], index: 0, kind: input, shape index: {}]
  %s1 = inlined_call_operand.hbm [shape: f32[128,128], index: 1, kind: input, shape index: {}]
  %s2 = inlined_call_operand.hbm [shape: f32[128,128], index: 2, kind: input, shape index: {}]
  %s3 = inlined_call_operand.hbm [shape: f32[128,128], index: 3, kind: input, shape index: {}]
  %s4 = inlined_call_operand.hbm [shape: f32[128,128], index: 4, kind: input, shape index: {}]
  %s5 = inlined_call_operand.<no memory space> [shape: f32[1,1], index: 5, kind: input, shape index: {}]
  %s6 = inlined_call_operand.hbm [shape: bf16[128,128], index: 6, kind: output, shape index: {0}]
  %s7 = inlined_call_operand.hbm [shape: f32[1,1], index: 7, kind: output, shape index: {1}]
  %8 = xla_tuple %s6, %s7
  %s9 = sld [smem:[#allocation0]]
  $region62: #{tpu_custom_call.1} parent=0
    _
  %s11 = ssub.s32 1, %s9
  %s12 = scalar_select 0, %s11, %s9
  %13 = sst [smem:[#allocation2]] %s5
  $region1: #{tpu_custom_call.1} parent=0
    #allocation3 [shape = 'u8[65536]{0}', space=vmem, size = 0x10000, scoped, tag = 'input window, operand 0, single buffered']
    #allocation4 [shape = 's32[1]{0}', space=sflag, size = 0x4, scoped, tag = 'scoped memory for tpu_custom_call.1']
    #allocation5 [shape = 's32[1]{0}', space=sflag, size = 0x4, scoped, tag = 'scoped memory for tpu_custom_call.1']
    #allocation6 [shape = 'u8[65536]{0}', space=vmem, size = 0x10000, scoped, tag = 'input window, operand 1, single buffered']
    #allocation7 [shape = 's32[1]{0}', space=sflag, size = 0x4, scoped, tag = 'scoped memory for tpu_custom_call.1']
    #allocation8 [shape = 'u8[65536]{0}', space=vmem, size = 0x10000, scoped, tag = 'input window, operand 2, single buffered']
    #allocation9 [shape = 'u8[65536]{0}', space=vmem, size = 0x10000, scoped, tag = 'input window, operand 3, single buffered']
    #allocation10 [shape = 's32[1]{0}', space=sflag, size = 0x4, scoped, tag = 'scoped memory for tpu_custom_call.1']
    #allocation11 [shape = 'u8[65536]{0}', space=vmem, size = 0x10000, scoped, tag = 'input window, operand 4, single buffered']
    #allocation12 [shape = 'u8[32768]{0}', space=vmem, size = 0x8000, scoped, tag = 'output window, operand 0, single buffered']
    #allocation13 [shape = 'u8[512]{0}', space=vmem, size = 0x400, scoped, tag = 'output window, operand 1, single buffered']
    #allocation14 [shape = 's32[1]{0}', space=sflag, size = 0x4, scoped, tag = 'scoped memory for tpu_custom_call.1']
    %14 = vsyncpa [#allocation4], 0
    %15 = vsyncpa [#allocation7], 0
    %16 = vsyncpa [#allocation10], 0
    %17 = vsyncpa [#allocation5], 0
    %18 = vsyncpa [#allocation14], 0
    // Predicated region
    $region2: #{tpu_custom_call.1} parent=1 // pred_check
      _
    $region3: #{tpu_custom_call.1} parent=1 // pred_check_branch
      %20 = sbr.rel (0) target = $region5
    $region4: #{tpu_custom_call.1} parent=1 // pred_region
      %s22 = ssub.s32 2048, 2048
      %23 = vsyncadd [#allocation4], %s22
      %s24 = sshll.u32 [#allocation3], 4
      %s25 = int_to_ptr.vmem [resolvable:$true] %s24
      %30 = dma.hbm_to_vmem [thread:$0]  %s0, 2048, %s25, [#allocation4], 128, 128, 8
    $region5: #{tpu_custom_call.1} parent=1 // pred_fallthru
      _
    // Predicated region
    $region6: #{tpu_custom_call.1} parent=1 // pred_check
      _
    $region7: #{tpu_custom_call.1} parent=1 // pred_check_branch
      %32 = sbr.rel (0) target = $region9
    $region8: #{tpu_custom_call.1} parent=1 // pred_region
      %s34 = ssub.s32 2048, 2048
      %35 = vsyncadd [#allocation7], %s34
      %s36 = sshll.u32 [#allocation6], 4
      %s37 = int_to_ptr.vmem [resolvable:$true] %s36
      %42 = dma.hbm_to_vmem [thread:$0]  %s1, 2048, %s37, [#allocation7], 128, 128, 8
    $region9: #{tpu_custom_call.1} parent=1 // pred_fallthru
      _
    // Predicated region
    $region10: #{tpu_custom_call.1} parent=1 // pred_check
      _
    $region11: #{tpu_custom_call.1} parent=1 // pred_check_branch
      %44 = sbr.rel (0) target = $region13
    $region12: #{tpu_custom_call.1} parent=1 // pred_region
      %s46 = ssub.s32 2048, 2048
      %47 = vsyncadd [#allocation7], %s46
      %s48 = sshll.u32 [#allocation8], 4
      %s49 = int_to_ptr.vmem [resolvable:$true] %s48
      %54 = dma.hbm_to_vmem [thread:$0]  %s2, 2048, %s49, [#allocation7], 128, 128, 8
    $region13: #{tpu_custom_call.1} parent=1 // pred_fallthru
      _
    // Predicated region
    $region14: #{tpu_custom_call.1} parent=1 // pred_check
      _
    $region15: #{tpu_custom_call.1} parent=1 // pred_check_branch
      %56 = sbr.rel (0) target = $region17
    $region16: #{tpu_custom_call.1} parent=1 // pred_region
      %s58 = ssub.s32 2048, 2048
      %59 = vsyncadd [#allocation10], %s58
      %s60 = sshll.u32 [#allocation9], 4
      %s61 = int_to_ptr.vmem [resolvable:$true] %s60
      %66 = dma.hbm_to_vmem [thread:$0]  %s3, 2048, %s61, [#allocation10], 128, 128, 8
    $region17: #{tpu_custom_call.1} parent=1 // pred_fallthru
      _
    // Predicated region
    $region18: #{tpu_custom_call.1} parent=1 // pred_check
      _
    $region19: #{tpu_custom_call.1} parent=1 // pred_check_branch
      %68 = sbr.rel (0) target = $region21
    $region20: #{tpu_custom_call.1} parent=1 // pred_region
      %s70 = ssub.s32 2048, 2048
      %71 = vsyncadd [#allocation10], %s70
      %s72 = sshll.u32 [#allocation11], 4
      %s73 = int_to_ptr.vmem [resolvable:$true] %s72
      %78 = dma.hbm_to_vmem [thread:$0]  %s4, 2048, %s73, [#allocation10], 128, 128, 8
    $region21: #{tpu_custom_call.1} parent=1 // pred_fallthru
      _
    // Predicated region
    $region22: #{tpu_custom_call.1} parent=1 // pred_check
      _
    $region23: #{tpu_custom_call.1} parent=1 // pred_check_branch
      %80 = sbr.rel (0) target = $region25
    $region24: #{tpu_custom_call.1} parent=1 // pred_region
      _
    $region25: #{tpu_custom_call.1} parent=1 // pred_fallthru
      _
    // Predicated region
    $region26: #{tpu_custom_call.1} parent=1 // pred_check
      _
    $region27: #{tpu_custom_call.1} parent=1 // pred_check_branch
      %82 = sbr.rel (0) target = $region29
    $region28: #{tpu_custom_call.1} parent=1 // pred_region
      %83 = dma.done [#allocation4], 2048
    $region29: #{tpu_custom_call.1} parent=1 // pred_fallthru
      _
    // Predicated region
    $region30: #{tpu_custom_call.1} parent=1 // pred_check
      _
    $region31: #{tpu_custom_call.1} parent=1 // pred_check_branch
      %85 = sbr.rel (0) target = $region33
    $region32: #{tpu_custom_call.1} parent=1 // pred_region
      %86 = dma.done [#allocation7], 2048
    $region33: #{tpu_custom_call.1} parent=1 // pred_fallthru
      _
    // Predicated region
    $region34: #{tpu_custom_call.1} parent=1 // pred_check
      _
    $region35: #{tpu_custom_call.1} parent=1 // pred_check_branch
      %88 = sbr.rel (0) target = $region37
    $region36: #{tpu_custom_call.1} parent=1 // pred_region
      %89 = dma.done [#allocation7], 2048
    $region37: #{tpu_custom_call.1} parent=1 // pred_fallthru
      _
    // Predicated region
    $region38: #{tpu_custom_call.1} parent=1 // pred_check
      _
    $region39: #{tpu_custom_call.1} parent=1 // pred_check_branch
      %91 = sbr.rel (0) target = $region41
    $region40: #{tpu_custom_call.1} parent=1 // pred_region
      %92 = dma.done [#allocation10], 2048
    $region41: #{tpu_custom_call.1} parent=1 // pred_fallthru
      _
    // Predicated region
    $region42: #{tpu_custom_call.1} parent=1 // pred_check
      _
    $region43: #{tpu_custom_call.1} parent=1 // pred_check_branch
      %94 = sbr.rel (0) target = $region45
    $region44: #{tpu_custom_call.1} parent=1 // pred_region
      %95 = dma.done [#allocation10], 2048
    $region45: #{tpu_custom_call.1} parent=1 // pred_fallthru
      _
    %s96 = sld [smem:[#allocation2]]
    %v97 = vld [vmem:[#allocation3] sm:$0xff]
    %v98 = vld [vmem:[#allocation3 + $0x8] sm:$0xff]
    %v99 = vld [vmem:[#allocation3 + $0x10] sm:$0xff]
    %v100 = vld [vmem:[#allocation3 + $0x18] sm:$0xff]
    %v101 = vld [vmem:[#allocation3 + $0x20] sm:$0xff]
    %v102 = vld [vmem:[#allocation3 + $0x28] sm:$0xff]
    %v103 = vld [vmem:[#allocation3 + $0x30] sm:$0xff]
    %v104 = vld [vmem:[#allocation3 + $0x38] sm:$0xff]
    %v105 = vld [vmem:[#allocation3 + $0x40] sm:$0xff]
    %v106 = vld [vmem:[#allocation3 + $0x48] sm:$0xff]
    %v107 = vld [vmem:[#allocation3 + $0x50] sm:$0xff]
    %v108 = vld [vmem:[#allocation3 + $0x58] sm:$0xff]
    %v109 = vld [vmem:[#allocation3 + $0x60] sm:$0xff]
    %v110 = vld [vmem:[#allocation3 + $0x68] sm:$0xff]
    %v111 = vld [vmem:[#allocation3 + $0x70] sm:$0xff]
    %v112 = vld [vmem:[#allocation3 + $0x78] sm:$0xff]
    %v113 = vld [vmem:[#allocation6] sm:$0xff]
    %v114 = vld [vmem:[#allocation6 + $0x8] sm:$0xff]
    %v115 = vld [vmem:[#allocation6 + $0x10] sm:$0xff]
    %v116 = vld [vmem:[#allocation6 + $0x18] sm:$0xff]
    %v117 = vld [vmem:[#allocation6 + $0x20] sm:$0xff]
    %v118 = vld [vmem:[#allocation6 + $0x28] sm:$0xff]
    %v119 = vld [vmem:[#allocation6 + $0x30] sm:$0xff]
    %v120 = vld [vmem:[#allocation6 + $0x38] sm:$0xff]
    %v121 = vld [vmem:[#allocation6 + $0x40] sm:$0xff]
    %v122 = vld [vmem:[#allocation6 + $0x48] sm:$0xff]
    %v123 = vld [vmem:[#allocation6 + $0x50] sm:$0xff]
    %v124 = vld [vmem:[#allocation6 + $0x58] sm:$0xff]
    %v125 = vld [vmem:[#allocation6 + $0x60] sm:$0xff]
    %v126 = vld [vmem:[#allocation6 + $0x68] sm:$0xff]
    %v127 = vld [vmem:[#allocation6 + $0x70] sm:$0xff]
    %v128 = vld [vmem:[#allocation6 + $0x78] sm:$0xff]
    %v129 = vmul.f32 %v113, 0.5
    %v130 = vmul.f32 %v114, 0.5
    %v131 = vmul.f32 %v115, 0.5
    %v132 = vmul.f32 %v116, 0.5
    %v133 = vmul.f32 %v117, 0.5
    %v134 = vmul.f32 %v118, 0.5
    %v135 = vmul.f32 %v119, 0.5
    %v136 = vmul.f32 %v120, 0.5
    %v137 = vmul.f32 %v121, 0.5
    %v138 = vmul.f32 %v122, 0.5
    %v139 = vmul.f32 %v123, 0.5
    %v140 = vmul.f32 %v124, 0.5
    %v141 = vmul.f32 %v125, 0.5
    %v142 = vmul.f32 %v126, 0.5
    %v143 = vmul.f32 %v127, 0.5
    %v144 = vmul.f32 %v128, 0.5
    %v145 = vmul.f32 %v129, 1.442695
    %v146 = vpow.pop %v145
    %v147 = vmul.f32 %v130, 1.442695
    %v148 = vpow.pop %v147
    %v149 = vmul.f32 %v131, 1.442695
    %v150 = vpow.pop %v149
    %v151 = vmul.f32 %v132, 1.442695
    %v152 = vpow.pop %v151
    %v153 = vmul.f32 %v133, 1.442695
    %v154 = vpow.pop %v153
    %v155 = vmul.f32 %v134, 1.442695
    %v156 = vpow.pop %v155
    %v157 = vmul.f32 %v135, 1.442695
    %v158 = vpow.pop %v157
    %v159 = vmul.f32 %v136, 1.442695
    %v160 = vpow.pop %v159
    %v161 = vmul.f32 %v137, 1.442695
    %v162 = vpow.pop %v161
    %v163 = vmul.f32 %v138, 1.442695
    %v164 = vpow.pop %v163
    %v165 = vmul.f32 %v139, 1.442695
    %v166 = vpow.pop %v165
    %v167 = vmul.f32 %v140, 1.442695
    %v168 = vpow.pop %v167
    %v169 = vmul.f32 %v141, 1.442695
    %v170 = vpow.pop %v169
    %v171 = vmul.f32 %v142, 1.442695
    %v172 = vpow.pop %v171
    %v173 = vmul.f32 %v143, 1.442695
    %v174 = vpow.pop %v173
    %v175 = vmul.f32 %v144, 1.442695
    %v176 = vpow.pop %v175
    %v177 = vld [vmem:[#allocation8] sm:$0xff]
    %v178 = vld [vmem:[#allocation8 + $0x8] sm:$0xff]
    %v179 = vld [vmem:[#allocation8 + $0x10] sm:$0xff]
    %v180 = vld [vmem:[#allocation8 + $0x18] sm:$0xff]
    %v181 = vld [vmem:[#allocation8 + $0x20] sm:$0xff]
    %v182 = vld [vmem:[#allocation8 + $0x28] sm:$0xff]
    %v183 = vld [vmem:[#allocation8 + $0x30] sm:$0xff]
    %v184 = vld [vmem:[#allocation8 + $0x38] sm:$0xff]
    %v185 = vld [vmem:[#allocation8 + $0x40] sm:$0xff]
    %v186 = vld [vmem:[#allocation8 + $0x48] sm:$0xff]
    %v187 = vld [vmem:[#allocation8 + $0x50] sm:$0xff]
    %v188 = vld [vmem:[#allocation8 + $0x58] sm:$0xff]
    %v189 = vld [vmem:[#allocation8 + $0x60] sm:$0xff]
    %v190 = vld [vmem:[#allocation8 + $0x68] sm:$0xff]
    %v191 = vld [vmem:[#allocation8 + $0x70] sm:$0xff]
    %v192 = vld [vmem:[#allocation8 + $0x78] sm:$0xff]
    %v193 = vmul.f32 %v146, %v177
    %v194 = vmul.f32 %v148, %v178
    %v195 = vmul.f32 %v150, %v179
    %v196 = vmul.f32 %v152, %v180
    %v197 = vmul.f32 %v154, %v181
    %v198 = vmul.f32 %v156, %v182
    %v199 = vmul.f32 %v158, %v183
    %v200 = vmul.f32 %v160, %v184
    %v201 = vmul.f32 %v162, %v185
    %v202 = vmul.f32 %v164, %v186
    %v203 = vmul.f32 %v166, %v187
    %v204 = vmul.f32 %v168, %v188
    %v205 = vmul.f32 %v170, %v189
    %v206 = vmul.f32 %v172, %v190
    %v207 = vmul.f32 %v174, %v191
    %v208 = vmul.f32 %v176, %v192
    %v209 = vstv %s96
    %v210 = vmul.f32 %v193, %v209
    %v211 = vmul.f32 %v194, %v209
    %v212 = vmul.f32 %v195, %v209
    %v213 = vmul.f32 %v196, %v209
    %v214 = vmul.f32 %v197, %v209
    %v215 = vmul.f32 %v198, %v209
    %v216 = vmul.f32 %v199, %v209
    %v217 = vmul.f32 %v200, %v209
    %v218 = vmul.f32 %v201, %v209
    %v219 = vmul.f32 %v202, %v209
    %v220 = vmul.f32 %v203, %v209
    %v221 = vmul.f32 %v204, %v209
    %v222 = vmul.f32 %v205, %v209
    %v223 = vmul.f32 %v206, %v209
    %v224 = vmul.f32 %v207, %v209
    %v225 = vmul.f32 %v208, %v209
    %v226 = vadd.f32 %v97, %v210
    %v227 = vadd.f32 %v98, %v211
    %v228 = vadd.f32 %v99, %v212
    %v229 = vadd.f32 %v100, %v213
    %v230 = vadd.f32 %v101, %v214
    %v231 = vadd.f32 %v102, %v215
    %v232 = vadd.f32 %v103, %v216
    %v233 = vadd.f32 %v104, %v217
    %v234 = vadd.f32 %v105, %v218
    %v235 = vadd.f32 %v106, %v219
    %v236 = vadd.f32 %v107, %v220
    %v237 = vadd.f32 %v108, %v221
    %v238 = vadd.f32 %v109, %v222
    %v239 = vadd.f32 %v110, %v223
    %v240 = vadd.f32 %v111, %v224
    %v241 = vadd.f32 %v112, %v225
    %v242 = vpack.c.bf16 %v227, %v226
    %v243 = vpack.c.bf16 %v229, %v228
    %v244 = vpack.c.bf16 %v231, %v230
    %v245 = vpack.c.bf16 %v233, %v232
    %v246 = vpack.c.bf16 %v235, %v234
    %v247 = vpack.c.bf16 %v237, %v236
    %v248 = vpack.c.bf16 %v239, %v238
    %v249 = vpack.c.bf16 %v241, %v240
    %v258 = vunpack.c.l.b16 %v242
    %v259 = vunpack.c.h.b16 %v242
    %v260 = vunpack.c.l.b16 %v243
    %v261 = vunpack.c.h.b16 %v243
    %v262 = vunpack.c.l.b16 %v244
    %v263 = vunpack.c.h.b16 %v244
    %v264 = vunpack.c.l.b16 %v245
    %v265 = vunpack.c.h.b16 %v245
    %v266 = vunpack.c.l.b16 %v246
    %v267 = vunpack.c.h.b16 %v246
    %v268 = vunpack.c.l.b16 %v247
    %v269 = vunpack.c.h.b16 %v247
    %v270 = vunpack.c.l.b16 %v248
    %v271 = vunpack.c.h.b16 %v248
    %v272 = vunpack.c.l.b16 %v249
    %v273 = vunpack.c.h.b16 %v249
    %v274 = vpack.c.b16 %v258, %v258
    %v275 = vpack.c.b16 %v259, %v259
    %v276 = vpack.c.b16 %v260, %v260
    %v277 = vpack.c.b16 %v261, %v261
    %v278 = vpack.c.b16 %v262, %v262
    %v279 = vpack.c.b16 %v263, %v263
    %v280 = vpack.c.b16 %v264, %v264
    %v281 = vpack.c.b16 %v265, %v265
    %v282 = vpack.c.b16 %v266, %v266
    %v283 = vpack.c.b16 %v267, %v267
    %v284 = vpack.c.b16 %v268, %v268
    %v285 = vpack.c.b16 %v269, %v269
    %v286 = vpack.c.b16 %v270, %v270
    %v287 = vpack.c.b16 %v271, %v271
    %v288 = vpack.c.b16 %v272, %v272
    %v289 = vpack.c.b16 %v273, %v273
    %306 = vst [vmem:[#allocation12] sm:$0xf] %v274
    %307 = vst [vmem:[#allocation12 + $0x4] sm:$0xf] %v275
    %308 = vst [vmem:[#allocation12 + $0x8] sm:$0xf] %v276
    %309 = vst [vmem:[#allocation12 + $0xc] sm:$0xf] %v277
    %310 = vst [vmem:[#allocation12 + $0x10] sm:$0xf] %v278
    %311 = vst [vmem:[#allocation12 + $0x14] sm:$0xf] %v279
    %312 = vst [vmem:[#allocation12 + $0x18] sm:$0xf] %v280
    %313 = vst [vmem:[#allocation12 + $0x1c] sm:$0xf] %v281
    %314 = vst [vmem:[#allocation12 + $0x20] sm:$0xf] %v282
    %315 = vst [vmem:[#allocation12 + $0x24] sm:$0xf] %v283
    %316 = vst [vmem:[#allocation12 + $0x28] sm:$0xf] %v284
    %317 = vst [vmem:[#allocation12 + $0x2c] sm:$0xf] %v285
    %318 = vst [vmem:[#allocation12 + $0x30] sm:$0xf] %v286
    %319 = vst [vmem:[#allocation12 + $0x34] sm:$0xf] %v287
    %320 = vst [vmem:[#allocation12 + $0x38] sm:$0xf] %v288
    %321 = vst [vmem:[#allocation12 + $0x3c] sm:$0xf] %v289
    %v322 = vld [vmem:[#allocation9] sm:$0xff]
    %v323 = vld [vmem:[#allocation9 + $0x8] sm:$0xff]
    %v324 = vld [vmem:[#allocation9 + $0x10] sm:$0xff]
    %v325 = vld [vmem:[#allocation9 + $0x18] sm:$0xff]
    %v326 = vld [vmem:[#allocation9 + $0x20] sm:$0xff]
    %v327 = vld [vmem:[#allocation9 + $0x28] sm:$0xff]
    %v328 = vld [vmem:[#allocation9 + $0x30] sm:$0xff]
    %v329 = vld [vmem:[#allocation9 + $0x38] sm:$0xff]
    %v330 = vld [vmem:[#allocation9 + $0x40] sm:$0xff]
    %v331 = vld [vmem:[#allocation9 + $0x48] sm:$0xff]
    %v332 = vld [vmem:[#allocation9 + $0x50] sm:$0xff]
    %v333 = vld [vmem:[#allocation9 + $0x58] sm:$0xff]
    %v334 = vld [vmem:[#allocation9 + $0x60] sm:$0xff]
    %v335 = vld [vmem:[#allocation9 + $0x68] sm:$0xff]
    %v336 = vld [vmem:[#allocation9 + $0x70] sm:$0xff]
    %v337 = vld [vmem:[#allocation9 + $0x78] sm:$0xff]
    %v338 = vld [vmem:[#allocation11] sm:$0xff]
    %v339 = vld [vmem:[#allocation11 + $0x8] sm:$0xff]
    %v340 = vld [vmem:[#allocation11 + $0x10] sm:$0xff]
    %v341 = vld [vmem:[#allocation11 + $0x18] sm:$0xff]
    %v342 = vld [vmem:[#allocation11 + $0x20] sm:$0xff]
    %v343 = vld [vmem:[#allocation11 + $0x28] sm:$0xff]
    %v344 = vld [vmem:[#allocation11 + $0x30] sm:$0xff]
    %v345 = vld [vmem:[#allocation11 + $0x38] sm:$0xff]
    %v346 = vld [vmem:[#allocation11 + $0x40] sm:$0xff]
    %v347 = vld [vmem:[#allocation11 + $0x48] sm:$0xff]
    %v348 = vld [vmem:[#allocation11 + $0x50] sm:$0xff]
    %v349 = vld [vmem:[#allocation11 + $0x58] sm:$0xff]
    %v350 = vld [vmem:[#allocation11 + $0x60] sm:$0xff]
    %v351 = vld [vmem:[#allocation11 + $0x68] sm:$0xff]
    %v352 = vld [vmem:[#allocation11 + $0x70] sm:$0xff]
    %v353 = vld [vmem:[#allocation11 + $0x78] sm:$0xff]
    %v354 = vsub.f32 %v113, %v338
    %v355 = vsub.f32 %v114, %v339
    %v356 = vsub.f32 %v115, %v340
    %v357 = vsub.f32 %v116, %v341
    %v358 = vsub.f32 %v117, %v342
    %v359 = vsub.f32 %v118, %v343
    %v360 = vsub.f32 %v119, %v344
    %v361 = vsub.f32 %v120, %v345
    %v362 = vsub.f32 %v121, %v346
    %v363 = vsub.f32 %v122, %v347
    %v364 = vsub.f32 %v123, %v348
    %v365 = vsub.f32 %v124, %v349
    %v366 = vsub.f32 %v125, %v350
    %v367 = vsub.f32 %v126, %v351
    %v368 = vsub.f32 %v127, %v352
    %v369 = vsub.f32 %v128, %v353
    %v370 = vmul.f32 %v354, 1.442695
    %v371 = vpow.pop %v370
    %v372 = vmul.f32 %v355, 1.442695
    %v373 = vpow.pop %v372
    %v374 = vmul.f32 %v356, 1.442695
    %v375 = vpow.pop %v374
    %v376 = vmul.f32 %v357, 1.442695
    %v377 = vpow.pop %v376
    %v378 = vmul.f32 %v358, 1.442695
    %v379 = vpow.pop %v378
    %v380 = vmul.f32 %v359, 1.442695
    %v381 = vpow.pop %v380
    %v382 = vmul.f32 %v360, 1.442695
    %v383 = vpow.pop %v382
    %v384 = vmul.f32 %v361, 1.442695
    %v385 = vpow.pop %v384
    %v386 = vmul.f32 %v362, 1.442695
    %v387 = vpow.pop %v386
    %v388 = vmul.f32 %v363, 1.442695
    %v389 = vpow.pop %v388
    %v390 = vmul.f32 %v364, 1.442695
    %v391 = vpow.pop %v390
    %v392 = vmul.f32 %v365, 1.442695
    %v393 = vpow.pop %v392
    %v394 = vmul.f32 %v366, 1.442695
    %v395 = vpow.pop %v394
    %v396 = vmul.f32 %v367, 1.442695
    %v397 = vpow.pop %v396
    %v398 = vmul.f32 %v368, 1.442695
    %v399 = vpow.pop %v398
    %v400 = vmul.f32 %v369, 1.442695
    %v401 = vpow.pop %v400
    %v402 = vsub.f32 %v97, %v322
    %v403 = vsub.f32 %v98, %v323
    %v404 = vsub.f32 %v99, %v324
    %v405 = vsub.f32 %v100, %v325
    %v406 = vsub.f32 %v101, %v326
    %v407 = vsub.f32 %v102, %v327
    %v408 = vsub.f32 %v103, %v328
    %v409 = vsub.f32 %v104, %v329
    %v410 = vsub.f32 %v105, %v330
    %v411 = vsub.f32 %v106, %v331
    %v412 = vsub.f32 %v107, %v332
    %v413 = vsub.f32 %v108, %v333
    %v414 = vsub.f32 %v109, %v334
    %v415 = vsub.f32 %v110, %v335
    %v416 = vsub.f32 %v111, %v336
    %v417 = vsub.f32 %v112, %v337
    %v418 = vmul.f32 %v402, %v402
    %v419 = vmul.f32 %v403, %v403
    %v420 = vmul.f32 %v404, %v404
    %v421 = vmul.f32 %v405, %v405
    %v422 = vmul.f32 %v406, %v406
    %v423 = vmul.f32 %v407, %v407
    %v424 = vmul.f32 %v408, %v408
    %v425 = vmul.f32 %v409, %v409
    %v426 = vmul.f32 %v410, %v410
    %v427 = vmul.f32 %v411, %v411
    %v428 = vmul.f32 %v412, %v412
    %v429 = vmul.f32 %v413, %v413
    %v430 = vmul.f32 %v414, %v414
    %v431 = vmul.f32 %v415, %v415
    %v432 = vmul.f32 %v416, %v416
    %v433 = vmul.f32 %v417, %v417
    %v434 = vsub.f32 0.0, %v338
    %v435 = vsub.f32 0.0, %v339
    %v436 = vsub.f32 0.0, %v340
    %v437 = vsub.f32 0.0, %v341
    %v438 = vsub.f32 0.0, %v342
    %v439 = vsub.f32 0.0, %v343
    %v440 = vsub.f32 0.0, %v344
    %v441 = vsub.f32 0.0, %v345
    %v442 = vsub.f32 0.0, %v346
    %v443 = vsub.f32 0.0, %v347
    %v444 = vsub.f32 0.0, %v348
    %v445 = vsub.f32 0.0, %v349
    %v446 = vsub.f32 0.0, %v350
    %v447 = vsub.f32 0.0, %v351
    %v448 = vsub.f32 0.0, %v352
    %v449 = vsub.f32 0.0, %v353
    %v450 = vmul.f32 %v434, 1.442695
    %v451 = vpow.pop %v450
    %v452 = vmul.f32 %v435, 1.442695
    %v453 = vpow.pop %v452
    %v454 = vmul.f32 %v436, 1.442695
    %v455 = vpow.pop %v454
    %v456 = vmul.f32 %v437, 1.442695
    %v457 = vpow.pop %v456
    %v458 = vmul.f32 %v438, 1.442695
    %v459 = vpow.pop %v458
    %v460 = vmul.f32 %v439, 1.442695
    %v461 = vpow.pop %v460
    %v462 = vmul.f32 %v440, 1.442695
    %v463 = vpow.pop %v462
    %v464 = vmul.f32 %v441, 1.442695
    %v465 = vpow.pop %v464
    %v466 = vmul.f32 %v442, 1.442695
    %v467 = vpow.pop %v466
    %v468 = vmul.f32 %v443, 1.442695
    %v469 = vpow.pop %v468
    %v470 = vmul.f32 %v444, 1.442695
    %v471 = vpow.pop %v470
    %v472 = vmul.f32 %v445, 1.442695
    %v473 = vpow.pop %v472
    %v474 = vmul.f32 %v446, 1.442695
    %v475 = vpow.pop %v474
    %v476 = vmul.f32 %v447, 1.442695
    %v477 = vpow.pop %v476
    %v478 = vmul.f32 %v448, 1.442695
    %v479 = vpow.pop %v478
    %v480 = vmul.f32 %v449, 1.442695
    %v481 = vpow.pop %v480
    %v482 = vmul.f32 %v418, %v451
    %v483 = vmul.f32 %v419, %v453
    %v484 = vmul.f32 %v420, %v455
    %v485 = vmul.f32 %v421, %v457
    %v486 = vmul.f32 %v422, %v459
    %v487 = vmul.f32 %v423, %v461
    %v488 = vmul.f32 %v424, %v463
    %v489 = vmul.f32 %v425, %v465
    %v490 = vmul.f32 %v426, %v467
    %v491 = vmul.f32 %v427, %v469
    %v492 = vmul.f32 %v428, %v471
    %v493 = vmul.f32 %v429, %v473
    %v494 = vmul.f32 %v430, %v475
    %v495 = vmul.f32 %v431, %v477
    %v496 = vmul.f32 %v432, %v479
    %v497 = vmul.f32 %v433, %v481
    %v498 = vadd.f32 %v371, %v482
    %v499 = vadd.f32 %v373, %v483
    %v500 = vadd.f32 %v375, %v484
    %v501 = vadd.f32 %v377, %v485
    %v502 = vadd.f32 %v379, %v486
    %v503 = vadd.f32 %v381, %v487
    %v504 = vadd.f32 %v383, %v488
    %v505 = vadd.f32 %v385, %v489
    %v506 = vadd.f32 %v387, %v490
    %v507 = vadd.f32 %v389, %v491
    %v508 = vadd.f32 %v391, %v492
    %v509 = vadd.f32 %v393, %v493
    %v510 = vadd.f32 %v395, %v494
    %v511 = vadd.f32 %v397, %v495
    %v512 = vadd.f32 %v399, %v496
    %v513 = vadd.f32 %v401, %v497
    %v514 = vsub.f32 %v498, 1.0
    %v515 = vsub.f32 %v499, 1.0
    %v516 = vsub.f32 %v500, 1.0
    %v517 = vsub.f32 %v501, 1.0
    %v518 = vsub.f32 %v502, 1.0
    %v519 = vsub.f32 %v503, 1.0
    %v520 = vsub.f32 %v504, 1.0
    %v521 = vsub.f32 %v505, 1.0
    %v522 = vsub.f32 %v506, 1.0
    %v523 = vsub.f32 %v507, 1.0
    %v524 = vsub.f32 %v508, 1.0
    %v525 = vsub.f32 %v509, 1.0
    %v526 = vsub.f32 %v510, 1.0
    %v527 = vsub.f32 %v511, 1.0
    %v528 = vsub.f32 %v512, 1.0
    %v529 = vsub.f32 %v513, 1.0
    %v530 = vadd.f32 %v514, %v338
    %v531 = vadd.f32 %v515, %v339
    %v532 = vadd.f32 %v516, %v340
    %v533 = vadd.f32 %v517, %v341
    %v534 = vadd.f32 %v518, %v342
    %v535 = vadd.f32 %v519, %v343
    %v536 = vadd.f32 %v520, %v344
    %v537 = vadd.f32 %v521, %v345
    %v538 = vadd.f32 %v522, %v346
    %v539 = vadd.f32 %v523, %v347
    %v540 = vadd.f32 %v524, %v348
    %v541 = vadd.f32 %v525, %v349
    %v542 = vadd.f32 %v526, %v350
    %v543 = vadd.f32 %v527, %v351
    %v544 = vadd.f32 %v528, %v352
    %v545 = vadd.f32 %v529, %v353
    %v546 = vsub.f32 %v530, %v113
    %v547 = vsub.f32 %v531, %v114
    %v548 = vsub.f32 %v532, %v115
    %v549 = vsub.f32 %v533, %v116
    %v550 = vsub.f32 %v534, %v117
    %v551 = vsub.f32 %v535, %v118
    %v552 = vsub.f32 %v536, %v119
    %v553 = vsub.f32 %v537, %v120
    %v554 = vsub.f32 %v538, %v121
    %v555 = vsub.f32 %v539, %v122
    %v556 = vsub.f32 %v540, %v123
    %v557 = vsub.f32 %v541, %v124
    %v558 = vsub.f32 %v542, %v125
    %v559 = vsub.f32 %v543, %v126
    %v560 = vsub.f32 %v544, %v127
    %v561 = vsub.f32 %v545, %v128
    %v562 = vmul.f32 %v546, 0.5
    %v563 = vmul.f32 %v547, 0.5
    %v564 = vmul.f32 %v548, 0.5
    %v565 = vmul.f32 %v549, 0.5
    %v566 = vmul.f32 %v550, 0.5
    %v567 = vmul.f32 %v551, 0.5
    %v568 = vmul.f32 %v552, 0.5
    %v569 = vmul.f32 %v553, 0.5
    %v570 = vmul.f32 %v554, 0.5
    %v571 = vmul.f32 %v555, 0.5
    %v572 = vmul.f32 %v556, 0.5
    %v573 = vmul.f32 %v557, 0.5
    %v574 = vmul.f32 %v558, 0.5
    %v575 = vmul.f32 %v559, 0.5
    %v576 = vmul.f32 %v560, 0.5
    %v577 = vmul.f32 %v561, 0.5
    %578 = vadd.xlane.f32.xlu0 %v562
    %v579 = vpop.xlane.xlu0 %578
    %580 = vadd.xlane.f32.xlu0 %v563
    %v581 = vpop.xlane.xlu0 %580
    %582 = vadd.xlane.f32.xlu0 %v564
    %v583 = vpop.xlane.xlu0 %582
    %584 = vadd.xlane.f32.xlu0 %v565
    %v585 = vpop.xlane.xlu0 %584
    %586 = vadd.xlane.f32.xlu0 %v566
    %v587 = vpop.xlane.xlu0 %586
    %588 = vadd.xlane.f32.xlu0 %v567
    %v589 = vpop.xlane.xlu0 %588
    %590 = vadd.xlane.f32.xlu0 %v568
    %v591 = vpop.xlane.xlu0 %590
    %592 = vadd.xlane.f32.xlu0 %v569
    %v593 = vpop.xlane.xlu0 %592
    %594 = vadd.xlane.f32.xlu0 %v570
    %v595 = vpop.xlane.xlu0 %594
    %596 = vadd.xlane.f32.xlu0 %v571
    %v597 = vpop.xlane.xlu0 %596
    %598 = vadd.xlane.f32.xlu0 %v572
    %v599 = vpop.xlane.xlu0 %598
    %600 = vadd.xlane.f32.xlu0 %v573
    %v601 = vpop.xlane.xlu0 %600
    %602 = vadd.xlane.f32.xlu0 %v574
    %v603 = vpop.xlane.xlu0 %602
    %604 = vadd.xlane.f32.xlu0 %v575
    %v605 = vpop.xlane.xlu0 %604
    %606 = vadd.xlane.f32.xlu0 %v576
    %v607 = vpop.xlane.xlu0 %606
    %608 = vadd.xlane.f32.xlu0 %v577
    %v609 = vpop.xlane.xlu0 %608
    %v610 = vadd.f32 %v579, %v581
    %v611 = vadd.f32 %v610, %v583
    %v612 = vadd.f32 %v611, %v585
    %v613 = vadd.f32 %v612, %v587
    %v614 = vadd.f32 %v613, %v589
    %v615 = vadd.f32 %v614, %v591
    %v616 = vadd.f32 %v615, %v593
    %v617 = vadd.f32 %v616, %v595
    %v618 = vadd.f32 %v617, %v597
    %v619 = vadd.f32 %v618, %v599
    %v620 = vadd.f32 %v619, %v601
    %v621 = vadd.f32 %v620, %v603
    %v622 = vadd.f32 %v621, %v605
    %v623 = vadd.f32 %v622, %v607
    %v624 = vadd.f32 %v623, %v609
    %v625 = vrot.slane %v624, 4
    %v626 = vadd.f32 %v624, %v625
    %v627 = vrot.slane %v626, 2
    %v628 = vadd.f32 %v626, %v627
    %v629 = vrot.slane %v628, 1
    %v630 = vadd.f32 %v628, %v629
    %vm631 = vcmask 0
    %632 = vst.msk [vmem:[#allocation13] sm:$0x1] %vm631, %v630
    // Predicated region
    $region46: #{tpu_custom_call.1} parent=1 // pred_check
      _
    $region47: #{tpu_custom_call.1} parent=1 // pred_check_branch
      %634 = sbr.rel (0) target = $region49
    $region48: #{tpu_custom_call.1} parent=1 // pred_region
      %s636 = ssub.s32 1024, 1024
      %637 = vsyncadd [#allocation5], %s636
      %s638 = sshll.u32 [#allocation12], 4
      %s639 = int_to_ptr.vmem [resolvable:$true] %s638
      %644 = dma.vmem_to_hbm [thread:$0]  %s639, 1024, %s6, [#allocation5], 64, 64, 4
    $region49: #{tpu_custom_call.1} parent=1 // pred_fallthru
      _
    // Predicated region
    $region50: #{tpu_custom_call.1} parent=1 // pred_check
      _
    $region51: #{tpu_custom_call.1} parent=1 // pred_check_branch
      %646 = sbr.rel (0) target = $region53
    $region52: #{tpu_custom_call.1} parent=1 // pred_region
      %s648 = ssub.s32 16, 16
      %649 = vsyncadd [#allocation14], %s648
      %s651 = sshll.u32 [#allocation13], 4
      %s652 = int_to_ptr.vmem [resolvable:$true] %s651
      %654 = dma.vmem_to_hbm [thread:$0]  %s652, 16, %s7, [#allocation14]
    $region53: #{tpu_custom_call.1} parent=1 // pred_fallthru
      _
    // Predicated region
    $region54: #{tpu_custom_call.1} parent=1 // pred_check
      _
    $region55: #{tpu_custom_call.1} parent=1 // pred_check_branch
      %656 = sbr.rel (0) target = $region57
    $region56: #{tpu_custom_call.1} parent=1 // pred_region
      %657 = dma.done [#allocation5], 1024
    $region57: #{tpu_custom_call.1} parent=1 // pred_fallthru
      _
    // Predicated region
    $region58: #{tpu_custom_call.1} parent=1 // pred_check
      _
    $region59: #{tpu_custom_call.1} parent=1 // pred_check_branch
      %659 = sbr.rel (0) target = $region61
    $region60: #{tpu_custom_call.1} parent=1 // pred_region
      %660 = dma.done [#allocation14], 16
    $region61: #{tpu_custom_call.1} parent=1 // pred_fallthru
      _
    %661 = vsyncpa [#allocation4], 1
    %662 = vsyncpa [#allocation7], 1
    %663 = vsyncpa [#allocation10], 1
    %664 = vsyncpa [#allocation5], 1
    %665 = vsyncpa [#allocation14], 1

</llo_original>
